<compile_context>
chip_gen: v6e
topology: v6e:2x2x1
jax: 0.10.0
libtpu: 0.0.40
codegen_flags: <defaults>
</compile_context>

<pallas_src>
import functools

import jax
import jax.numpy as jnp
from jax.experimental import pallas as pl
from jax.experimental.pallas import tpu as pltpu


def _round_up(n, m):
    return ((n + m - 1) // m) * m


def _vmem_capacity_bytes():
    """Generation-aware VMEM capacity (128 MiB on v5e/v6e, 64 MiB on v7x)."""
    try:
        return int(pltpu.get_tpu_info().vmem_capacity_bytes)
    except Exception:
        return 64 << 20  # conservative fallback if the query is unavailable


def _mlp_logsoftmax_kernel(n_layers, x_ref, *refs):
    """refs = (w0, b0, w1, b1, ..., out_ref). One (tb, in_feat) batch tile per call."""
    out_ref = refs[-1]
    param_refs = refs[:-1]

    x = x_ref[...]                           # bf16 (tb, in_feat)
    for i in range(n_layers):
        w = param_refs[2 * i][...]           # bf16 (in_i, out_i), VMEM-resident
        b = param_refs[2 * i + 1][...]       # f32  (1,  out_i)
        acc = jnp.dot(x, w, preferred_element_type=jnp.float32) + b
        acc = jnp.maximum(acc, 0.0)          # ReLU after every Linear (matches spec)
        # Hidden activations go back to bf16 (native MXU input dtype); the final
        # layer's logits stay f32 for an accurate log_softmax.
        x = acc if i == n_layers - 1 else acc.astype(jnp.bfloat16)

    m = jnp.max(x, axis=-1, keepdims=True)
    shifted = x - m
    lse = jnp.log(jnp.sum(jnp.exp(shifted), axis=-1, keepdims=True))
    out_ref[...] = (shifted - lse).astype(out_ref.dtype)


def prepare_params(weights, biases):
    """One-time parameter prep, OUTSIDE the forward hot path.

    weights[i]: (in_i, out_i) -> bf16; biases[i]: (out_i,) -> f32 (1, out_i).
    """
    params = []
    for w, b in zip(weights, biases):
        params.append(jnp.asarray(w, jnp.bfloat16))
        params.append(jnp.asarray(b, jnp.float32).reshape(1, -1))
    return tuple(params)


def simple_net_forward(x, params, *, batch_tile=2048, out_dtype=jnp.float32):
    """x: (bs, ...); params: flat tuple (w0, b0, w1, b1, ...) from prepare_params."""
    n_layers = len(params) // 2
    bs = x.shape[0]
    X = x.reshape(bs, -1)                     # flatten, same as seq.view(bs, -1)
    in_feat = X.shape[1]
    out_dim = params[-2].shape[1]

    # ---- batch tile: multiple of 16 (bf16 sublanes); 256 for full MXU M when the
    #      batch is large; keep >=2 grid steps for v7x megacore sharding. --------
    tb = min(_round_up(batch_tile, 16), _round_up(bs, 16))
    if bs >= 512:
        tb = _round_up(tb, 256)
    if _round_up(bs, tb) // tb == 1 and tb >= 512:
        tb //= 2
    bs_pad = _round_up(bs, tb)
    grid = (bs_pad // tb,)

    # ---- per-call input prep: cast to bf16, pad the batch axis only -------------
    if bs_pad == bs:
        Xp = X.astype(jnp.bfloat16)
    else:
        Xp = jnp.zeros((bs_pad, in_feat), jnp.bfloat16).at[:bs].set(
            X.astype(jnp.bfloat16))

    # ---- specs -------------------------------------------------------------------
    # Activations: batch-tiled, pipelined/double-buffered by BlockSpec.
    x_spec = pl.BlockSpec((tb, in_feat), lambda i: (i, 0))
    out_spec = pl.BlockSpec((tb, out_dim), lambda i: (i, 0))
    # Parameters: whole-array, VMEM-resident, single-buffered (constant over grid).
    param_specs = [pl.BlockSpec(memory_space=pltpu.MemorySpace.VMEM) for _ in params]

    # ---- generation-aware VMEM budget ---------------------------------------------
    cap = _vmem_capacity_bytes()
    param_bytes = sum(int(p.size) * p.dtype.itemsize for p in params)
    max_feat = max([in_feat] + [params[2 * i].shape[1] for i in range(n_layers)])
    act_bytes = 3 * tb * max_feat * 4                          # in-kernel f32 work set
    io_bytes = 2 * (tb * in_feat * 2 + tb * out_dim * jnp.dtype(out_dtype).itemsize)
    vmem_limit = int(min(max(2 * (param_bytes + act_bytes + io_bytes), 32 << 20),
                         int(cap * 0.9)))
    # TODO(synk): if param_bytes ever exceeds ~half of VMEM (possible on v7x's
    # 64 MiB with large hidden sizes), fall back to streaming weights
    # layer-by-layer (memory_space=pl.ANY + pltpu.emit_pipeline) instead of
    # keeping them resident; not needed at these sizes.

    kernel = functools.partial(_mlp_logsoftmax_kernel, n_layers)

    out_padded = pl.pallas_call(
        kernel,
        out_shape=jax.ShapeDtypeStruct((bs_pad, out_dim), out_dtype),
        grid=grid,
        in_specs=[x_spec] + param_specs,
        out_specs=out_spec,
        compiler_params=pltpu.CompilerParams(
            dimension_semantics=("parallel",),
            vmem_limit_bytes=vmem_limit,
        ),
    )(Xp, *params)

    return out_padded[:bs]


def init_params(layers, key):
    """Deterministic init matching nn.Linear shapes: weight (out,in), bias (out,).

    Weights are returned already transposed to (in, out) for the X @ W kernel.
    """
    weights, biases = [], []
    for i in range(len(layers) - 1):
        fan_in, fan_out = layers[i], layers[i + 1]
        key, kw, kb = jax.random.split(key, 3)
        bound = 1.0 / (fan_in ** 0.5)
        w = jax.random.uniform(kw, (fan_out, fan_in), jnp.float32, -bound, bound)
        b = jax.random.uniform(kb, (fan_out,), jnp.float32, -bound, bound)
        weights.append(w.T)  # (in, out)
        biases.append(b)
    return weights, biases


def reference_forward(x, weights, biases):
    """Pure-JAX f32 reference with the same semantics as the PyTorch module."""
    bs = x.shape[0]
    X = x.reshape(bs, -1).astype(jnp.float32)
    for w, b in zip(weights, biases):
        X = jnp.maximum(X @ w + b, 0.0)   # ReLU after every Linear, incl. the last
    return jax.nn.log_softmax(X, axis=-1)


if __name__ == "__main__":
    key = jax.random.PRNGKey(0)

    # Input: batch=2, channels=4, spatial=4x4  ->  flattened feature dim = 64
    layers = [64, 32, 16]
    key, kx = jax.random.split(key)
    x = jax.random.normal(kx, (2, 4, 4, 4), dtype=jnp.float32)

    weights, biases = init_params(layers, key)
    params = prepare_params(weights, biases)        # one-time, outside hot path

    fwd = jax.jit(simple_net_forward)
    out = jax.block_until_ready(fwd(x, params))

    # Sanity 1: shape and exp-sum-to-1 rows
    assert out.shape == (2, layers[-1])
    row_sums = jnp.exp(out).sum(axis=-1)
    assert bool(jnp.all(jnp.abs(row_sums - 1.0) < 1e-4))

    # Sanity 2: match f32 reference (bf16 matmuls -> loose tolerance)
    ref = reference_forward(x, weights, biases)
    assert bool(jnp.max(jnp.abs(out - ref)) < 5e-2)

    print("KERNEL_OK")
</pallas_src>

<mosaic_0001>
module attributes {stable_mosaic.version = 11 : i64} {
  func.func @_mlp_logsoftmax_kernel(%arg0: i32, %arg1: memref<16x64xbf16, #tpu.memory_space<vmem>>, %arg2: memref<64x32xbf16, #tpu.memory_space<vmem>>, %arg3: memref<1x32xf32, #tpu.memory_space<vmem>>, %arg4: memref<32x16xbf16, #tpu.memory_space<vmem>>, %arg5: memref<1x16xf32, #tpu.memory_space<vmem>>, %arg6: memref<16x16xf32, #tpu.memory_space<vmem>>) attributes {dimension_semantics = [#tpu.dimension_semantics<parallel>], iteration_bounds = array<i64: 1>, scalar_prefetch = 0 : i64, scratch_operands = 0 : i64, tpu.core_type = #tpu.core_type<tc>, window_params = [{transform_indices = @transform_0, window_bounds = array<i64: 16, 64>}, {pipeline_mode = #tpu.pipeline_mode<synchronous>, transform_indices = @transform_1, window_bounds = array<i64: 64, 32>}, {pipeline_mode = #tpu.pipeline_mode<synchronous>, transform_indices = @transform_2, window_bounds = array<i64: 1, 32>}, {pipeline_mode = #tpu.pipeline_mode<synchronous>, transform_indices = @transform_3, window_bounds = array<i64: 32, 16>}, {pipeline_mode = #tpu.pipeline_mode<synchronous>, transform_indices = @transform_4, window_bounds = array<i64: 1, 16>}, {transform_indices = @transform_5, window_bounds = array<i64: 16, 16>}]} {
    %c0 = arith.constant 0 : index
    %c0_0 = arith.constant 0 : index
    %0 = vector.load %arg1[%c0, %c0_0] : memref<16x64xbf16, #tpu.memory_space<vmem>>, vector<16x64xbf16>
    %c0_1 = arith.constant 0 : index
    %c0_2 = arith.constant 0 : index
    %1 = vector.load %arg2[%c0_1, %c0_2] : memref<64x32xbf16, #tpu.memory_space<vmem>>, vector<64x32xbf16>
    %c0_3 = arith.constant 0 : index
    %c0_4 = arith.constant 0 : index
    %2 = vector.load %arg3[%c0_3, %c0_4] : memref<1x32xf32, #tpu.memory_space<vmem>>, vector<1x32xf32>
    %cst = arith.constant dense<0.000000e+00> : vector<16x32xf32>
    %3 = tpu.matmul %0, %1, %cst {dimension_numbers = #tpu.dot_dimension_numbers<[1], [0], [0], [1], [0, 0, 1, 1], [], []>} : vector<16x64xbf16>, vector<64x32xbf16>, vector<16x32xf32> -> vector<16x32xf32>
    %4 = vector.broadcast %2 : vector<1x32xf32> to vector<16x32xf32>
    %5 = arith.addf %3, %4 : vector<16x32xf32>
    %cst_5 = arith.constant 0.000000e+00 : f32
    %6 = vector.broadcast %cst_5 : f32 to vector<16x32xf32>
    %7 = arith.maximumf %5, %6 : vector<16x32xf32>
    %8 = arith.truncf %7 : vector<16x32xf32> to vector<16x32xbf16>
    %c0_6 = arith.constant 0 : index
    %c0_7 = arith.constant 0 : index
    %9 = vector.load %arg4[%c0_6, %c0_7] : memref<32x16xbf16, #tpu.memory_space<vmem>>, vector<32x16xbf16>
    %c0_8 = arith.constant 0 : index
    %c0_9 = arith.constant 0 : index
    %10 = vector.load %arg5[%c0_8, %c0_9] : memref<1x16xf32, #tpu.memory_space<vmem>>, vector<1x16xf32>
    %cst_10 = arith.constant dense<0.000000e+00> : vector<16x16xf32>
    %11 = tpu.matmul %8, %9, %cst_10 {dimension_numbers = #tpu.dot_dimension_numbers<[1], [0], [0], [1], [0, 0, 1, 1], [], []>} : vector<16x32xbf16>, vector<32x16xbf16>, vector<16x16xf32> -> vector<16x16xf32>
    %12 = vector.broadcast %10 : vector<1x16xf32> to vector<16x16xf32>
    %13 = arith.addf %11, %12 : vector<16x16xf32>
    %cst_11 = arith.constant 0.000000e+00 : f32
    %14 = vector.broadcast %cst_11 : f32 to vector<16x16xf32>
    %15 = arith.maximumf %13, %14 : vector<16x16xf32>
    %cst_12 = arith.constant dense<0xFF800000> : vector<16xf32>
    %16 = vector.multi_reduction <maximumf>, %15, %cst_12 [1] : vector<16x16xf32> to vector<16xf32>
    %17 = vector.shape_cast %16 : vector<16xf32> to vector<16x1xf32>
    %18 = vector.broadcast %17 : vector<16x1xf32> to vector<16x16xf32>
    %19 = arith.subf %15, %18 : vector<16x16xf32>
    %20 = math.exp %19 : vector<16x16xf32>
    %cst_13 = arith.constant dense<0.000000e+00> : vector<16xf32>
    %21 = vector.multi_reduction <add>, %20, %cst_13 [1] : vector<16x16xf32> to vector<16xf32>
    %22 = vector.shape_cast %21 : vector<16xf32> to vector<16x1xf32>
    %23 = math.log %22 : vector<16x1xf32>
    %24 = vector.broadcast %23 : vector<16x1xf32> to vector<16x16xf32>
    %25 = arith.subf %19, %24 : vector<16x16xf32>
    %c0_14 = arith.constant 0 : index
    %c0_15 = arith.constant 0 : index
    %26 = vector.load %arg6[%c0_14, %c0_15] : memref<16x16xf32, #tpu.memory_space<vmem>>, vector<16x16xf32>
    tpu.vector_store %arg6[%c0_14, %c0_15], %25 {strides = array<i32>} : memref<16x16xf32, #tpu.memory_space<vmem>>, vector<16x16xf32>,
    return
  }
  func.func @transform_0(%arg0: i32) -> (i32, i32) {
    %c0_i32 = arith.constant 0 : i32
    %c0_i32_0 = arith.constant 0 : i32
    return %arg0, %c0_i32 : i32, i32
  }
  func.func @transform_1(%arg0: i32) -> (i32, i32) {
    %c0_i32 = arith.constant 0 : i32
    %c0_i32_0 = arith.constant 0 : i32
    %c0_i32_1 = arith.constant 0 : i32
    return %c0_i32, %c0_i32_0 : i32, i32
  }
  func.func @transform_2(%arg0: i32) -> (i32, i32) {
    %c0_i32 = arith.constant 0 : i32
    %c0_i32_0 = arith.constant 0 : i32
    %c0_i32_1 = arith.constant 0 : i32
    return %c0_i32, %c0_i32_0 : i32, i32
  }
  func.func @transform_3(%arg0: i32) -> (i32, i32) {
    %c0_i32 = arith.constant 0 : i32
    %c0_i32_0 = arith.constant 0 : i32
    %c0_i32_1 = arith.constant 0 : i32
    return %c0_i32, %c0_i32_0 : i32, i32
  }
  func.func @transform_4(%arg0: i32) -> (i32, i32) {
    %c0_i32 = arith.constant 0 : i32
    %c0_i32_0 = arith.constant 0 : i32
    %c0_i32_1 = arith.constant 0 : i32
    return %c0_i32, %c0_i32_0 : i32, i32
  }
  func.func @transform_5(%arg0: i32) -> (i32, i32) {
    %c0_i32 = arith.constant 0 : i32
    %c0_i32_0 = arith.constant 0 : i32
    return %arg0, %c0_i32 : i32, i32
  }
}

</mosaic_0001>

<llo_original>
// kernel: simple_net_forward.1
$region0: #{simple_net_forward.1}
  #allocation0 [shape = 'u32[]', space=smem, size = 0x4, offset = 0x4, fixed_abs, tag = 'smem constant byte address 0x4 - core index']
  #allocation1 [shape = 'u32[144,128]{1,0:T(1,128)}', space=vmem, size = 0x12000, scoped, tag = 'internal scratch']
  %s0 = inlined_call_operand.vmem [shape: bf16[16,64], index: 0, kind: input, shape index: {}]
  %s1 = inlined_call_operand.vmem [shape: bf16[64,32], index: 1, kind: input, shape index: {}]
  %s2 = inlined_call_operand.vmem [shape: f32[1,32], index: 2, kind: input, shape index: {}]
  %s3 = inlined_call_operand.vmem [shape: bf16[32,16], index: 3, kind: input, shape index: {}]
  %s4 = inlined_call_operand.vmem [shape: f32[1,16], index: 4, kind: input, shape index: {}]
  %s5 = inlined_call_operand.vmem [shape: f32[16,16], index: 5, kind: output, shape index: {}]
  %s6 = sld [smem:[#allocation0]]
  $region30: #{simple_net_forward.1} parent=0
    _
  %s8 = ssub.s32 1, %s6
  %s9 = scalar_select 0, %s8, %s6
  // Predicated region
  $region2: #{simple_net_forward.1} parent=0 // pred_check
    _
  $region3: #{simple_net_forward.1} parent=0 // pred_check_branch
    %11 = sbr.rel (0) target = $region5
  $region4: #{simple_net_forward.1} parent=0 // pred_region
    _
  $region5: #{simple_net_forward.1} parent=0 // pred_fallthru
    _
  // Predicated region
  $region6: #{simple_net_forward.1} parent=0 // pred_check
    _
  $region7: #{simple_net_forward.1} parent=0 // pred_check_branch
    %13 = sbr.rel (0) target = $region9
  $region8: #{simple_net_forward.1} parent=0 // pred_region
    _
  $region9: #{simple_net_forward.1} parent=0 // pred_fallthru
    _
  // Predicated region
  $region10: #{simple_net_forward.1} parent=0 // pred_check
    _
  $region11: #{simple_net_forward.1} parent=0 // pred_check_branch
    %15 = sbr.rel (0) target = $region13
  $region12: #{simple_net_forward.1} parent=0 // pred_region
    _
  $region13: #{simple_net_forward.1} parent=0 // pred_fallthru
    _
  // Predicated region
  $region14: #{simple_net_forward.1} parent=0 // pred_check
    _
  $region15: #{simple_net_forward.1} parent=0 // pred_check_branch
    %17 = sbr.rel (0) target = $region17
  $region16: #{simple_net_forward.1} parent=0 // pred_region
    _
  $region17: #{simple_net_forward.1} parent=0 // pred_fallthru
    _
  // Predicated region
  $region18: #{simple_net_forward.1} parent=0 // pred_check
    _
  $region19: #{simple_net_forward.1} parent=0 // pred_check_branch
    %19 = sbr.rel (0) target = $region21
  $region20: #{simple_net_forward.1} parent=0 // pred_region
    _
  $region21: #{simple_net_forward.1} parent=0 // pred_fallthru
    _
  %v21 = vld [vmem:[%s0] sm:$0xf]
  %v22 = vld [vmem:[%s0 + $0x4] sm:$0xf]
  %v23 = vld [vmem:[%s1] sm:$0xf]
  %v24 = vld [vmem:[%s1 + $0x4] sm:$0xf]
  %v25 = vld [vmem:[%s1 + $0x8] sm:$0xf]
  %v26 = vld [vmem:[%s1 + $0xc] sm:$0xf]
  %v27 = vld [vmem:[%s1 + $0x10] sm:$0xf]
  %v28 = vld [vmem:[%s1 + $0x14] sm:$0xf]
  %v29 = vld [vmem:[%s1 + $0x18] sm:$0xf]
  %v30 = vld [vmem:[%s1 + $0x1c] sm:$0xf]
  %v31 = vld [vmem:[%s2] sm:$0x1]
  %v33 = vlaneseq
  %v34 = vshrl.u32 %v33, 7
  %v35 = vsub.s32 0, %v34
  %v36 = vrot.slane %v31, %v35
  %v40 = vunpack.c.l.b16 %v21
  %v41 = vunpack.c.l.b16 %v22
  %v42 = vpack.c.b16 %v41, %v40
  %v51 = vunpack.c.l.b16 %v23
  %v52 = vunpack.c.l.b16 %v24
  %v53 = vunpack.c.l.b16 %v25
  %v54 = vunpack.c.l.b16 %v26
  %v55 = vunpack.c.l.b16 %v27
  %v56 = vunpack.c.l.b16 %v28
  %v57 = vunpack.c.l.b16 %v29
  %v58 = vunpack.c.l.b16 %v30
  %v59 = vpack.c.b16 %v52, %v51
  %v60 = vpack.c.b16 %v54, %v53
  %v61 = vpack.c.b16 %v56, %v55
  %v62 = vpack.c.b16 %v58, %v57
  %vm67 = vcmask 523264
  %v69 = vsel %vm67, %v42, 0
  %71 = vmatprep.subr.bf16.mxu0 0
  %72 = vmatpush1.bf16.msra.mxu0 0
  %73 = vmatprep.subr.bf16.mxu0 0
  %74 = vmatpush1.bf16.msra.mxu0 0
  %75 = vmatprep.subr.bf16.mxu0 0
  %76 = vmatpush1.bf16.msra.mxu0 0
  %77 = vmatprep.subr.bf16.mxu0 0
  %78 = vmatpush1.bf16.msra.mxu0 0
  %79 = vmatprep.subr.bf16.mxu0 0
  %80 = vmatpush1.bf16.msra.mxu0 %v62
  %81 = vmatprep.subr.bf16.mxu0 0
  %82 = vmatpush1.bf16.msra.mxu0 %v61
  %83 = vmatprep.subr.bf16.mxu0 0
  %84 = vmatpush1.bf16.msra.mxu0 %v60
  %85 = vmatprep.subr.bf16.mxu0 0
  %86 = vmatpush1.bf16.msra.mxu0 %v59
  %87 = vmatprep.subr.bf16.mxu0 0
  %88 = vmatpush2.bf16.msra.mxu0 0
  %89 = vmatprep.subr.bf16.mxu0 0
  %90 = vmatpush2.bf16.msra.mxu0 0
  %91 = vmatprep.subr.bf16.mxu0 0
  %92 = vmatpush2.bf16.msra.mxu0 0
  %93 = vmatprep.subr.bf16.mxu0 0
  %94 = vmatpush2.bf16.msra.mxu0 0
  %95 = vmatprep.subr.bf16.mxu0 0
  %96 = vmatpush2.bf16.msra.mxu0 0
  %97 = vmatprep.subr.bf16.mxu0 0
  %98 = vmatpush2.bf16.msra.mxu0 0
  %99 = vmatprep.subr.bf16.mxu0 0
  %100 = vmatpush2.bf16.msra.mxu0 0
  %101 = vmatprep.subr.bf16.mxu0 0
  %102 = vmatpush2.bf16.msra.mxu0 0
  %103 = vmatprep.mubr.bf16.mxu0 0
  %104 = vmatmul.mubr.bf16.gmra.mxu0 %v69
  %v105 = vpop.f32.mrf.mxu0
  %v106 = vadd.f32 %v36, %v105
  %v107 = vpop.f32.mrf.mxu0
  %v108 = vpop.f32.mrf.mxu0
  %v109 = vadd.f32 %v36, %v108
  %v110 = vpop.f32.mrf.mxu0
  %111 = vdwg.mxu0
  %v112 = vmax.f32 %v106, 0.0
  %v113 = vmax.f32 %v109, 0.0
  %v114 = vpack.c.bf16 %v113, %v112
  %v115 = vld [vmem:[%s3] sm:$0xf]
  %v116 = vld [vmem:[%s3 + $0x4] sm:$0xf]
  %v117 = vld [vmem:[%s3 + $0x8] sm:$0xf]
  %v118 = vld [vmem:[%s3 + $0xc] sm:$0xf]
  %v119 = vld [vmem:[%s4] sm:$0x1]
  %v121 = vlaneseq
  %v122 = vshrl.u32 %v121, 7
  %v123 = vsub.s32 0, %v122
  %v124 = vrot.slane %v119, %v123
  %v130 = vunpack.c.l.b16 %v115
  %v131 = vunpack.c.l.b16 %v116
  %v132 = vunpack.c.l.b16 %v117
  %v133 = vunpack.c.l.b16 %v118
  %v134 = vpack.c.b16 %v131, %v130
  %v135 = vpack.c.b16 %v133, %v132
  %vm138 = vcmask 261120
  %v140 = vsel %vm138, %v114, 0
  %142 = vmatprep.subr.bf16.mxu0 0
  %143 = vmatpush1.bf16.msra.mxu0 0
  %144 = vmatprep.subr.bf16.mxu0 0
  %145 = vmatpush1.bf16.msra.mxu0 0
  %146 = vmatprep.subr.bf16.mxu0 0
  %147 = vmatpush1.bf16.msra.mxu0 0
  %148 = vmatprep.subr.bf16.mxu0 0
  %149 = vmatpush1.bf16.msra.mxu0 0
  %150 = vmatprep.subr.bf16.mxu0 0
  %151 = vmatpush1.bf16.msra.mxu0 0
  %152 = vmatprep.subr.bf16.mxu0 0
  %153 = vmatpush1.bf16.msra.mxu0 0
  %154 = vmatprep.subr.bf16.mxu0 0
  %155 = vmatpush1.bf16.msra.mxu0 %v135
  %156 = vmatprep.subr.bf16.mxu0 0
  %157 = vmatpush1.bf16.msra.mxu0 %v134
  %158 = vmatprep.subr.bf16.mxu0 0
  %159 = vmatpush2.bf16.msra.mxu0 0
  %160 = vmatprep.subr.bf16.mxu0 0
  %161 = vmatpush2.bf16.msra.mxu0 0
  %162 = vmatprep.subr.bf16.mxu0 0
  %163 = vmatpush2.bf16.msra.mxu0 0
  %164 = vmatprep.subr.bf16.mxu0 0
  %165 = vmatpush2.bf16.msra.mxu0 0
  %166 = vmatprep.subr.bf16.mxu0 0
  %167 = vmatpush2.bf16.msra.mxu0 0
  %168 = vmatprep.subr.bf16.mxu0 0
  %169 = vmatpush2.bf16.msra.mxu0 0
  %170 = vmatprep.subr.bf16.mxu0 0
  %171 = vmatpush2.bf16.msra.mxu0 0
  %172 = vmatprep.subr.bf16.mxu0 0
  %173 = vmatpush2.bf16.msra.mxu0 0
  %174 = vmatprep.mubr.bf16.mxu0 0
  %175 = vmatmul.mubr.bf16.gmra.mxu0 %v140
  %v176 = vpop.f32.mrf.mxu0
  %v177 = vadd.f32 %v124, %v176
  %v178 = vpop.f32.mrf.mxu0
  %v179 = vpop.f32.mrf.mxu0
  %v180 = vadd.f32 %v124, %v179
  %v181 = vpop.f32.mrf.mxu0
  %182 = vdwg.mxu0
  %v183 = vmax.f32 %v177, 0.0
  %v184 = vmax.f32 %v180, 0.0
  %vm185 = vcmask 130048
  %v186 = vsel %vm185, %v183, -inf
  %187 = vmax.xlane.f32.xlu0 %v186
  %v188 = vpop.xlane.xlu0 %187
  %v189 = vsel %vm185, %v184, -inf
  %190 = vmax.xlane.f32.xlu0 %v189
  %v191 = vpop.xlane.xlu0 %190
  %v192 = vsub.f32 %v183, %v188
  %v193 = vsub.f32 %v184, %v191
  %v194 = vmul.f32 %v192, 1.442695
  %v195 = vpow.pop %v194
  %v196 = vmul.f32 %v193, 1.442695
  %v197 = vpow.pop %v196
  %v198 = vsel %vm185, %v195, 0.0
  %199 = vadd.xlane.f32.xlu0 %v198
  %v200 = vpop.xlane.xlu0 %199
  %v201 = vsel %vm185, %v197, 0.0
  %202 = vadd.xlane.f32.xlu0 %v201
  %v203 = vpop.xlane.xlu0 %202
  %v204 = vlog2.pop %v200
  %v205 = vmul.f32 %v204, 0.6931472
  %v206 = vlog2.pop %v203
  %v207 = vmul.f32 %v206, 0.6931472
  %v208 = vsub.f32 %v192, %v205
  %v209 = vsub.f32 %v193, %v207
  %210 = vst.msk [vmem:[%s5] sm:$0xff] %vm185, %v208
  %211 = vst.msk [vmem:[%s5 + $0x8] sm:$0xff] %vm185, %v209
  // Predicated region
  $region22: #{simple_net_forward.1} parent=0 // pred_check
    _
  $region23: #{simple_net_forward.1} parent=0 // pred_check_branch
    %213 = sbr.rel (0) target = $region25
  $region24: #{simple_net_forward.1} parent=0 // pred_region
    _
  $region25: #{simple_net_forward.1} parent=0 // pred_fallthru
    _
  // Predicated region
  $region26: #{simple_net_forward.1} parent=0 // pred_check
    _
  $region27: #{simple_net_forward.1} parent=0 // pred_check_branch
    %215 = sbr.rel (0) target = $region29
  $region28: #{simple_net_forward.1} parent=0 // pred_region
    _
  $region29: #{simple_net_forward.1} parent=0 // pred_fallthru
    _

</llo_original>
